<compile_context>
chip_gen: v5e
topology: v5e:2x2
jax: 0.10.0
libtpu: 0.0.40
codegen_flags: <defaults>
</compile_context>

<pallas_src>
import jax
import jax.numpy as jnp
from jax.experimental import pallas as pl
from jax.experimental.pallas import tpu as pltpu


def _round_up(x, m):
    return (x + m - 1) // m * m


def _sublane_packing(dtype):
    """Rows per 8-sublane group for a given dtype (8 f32, 16 bf16, 32 int8/fp8)."""
    itemsize = jnp.dtype(dtype).itemsize
    return 8 * max(1, 4 // itemsize)


def _mlp_kernel(x_ref, w1_ref, b1_ref, w2_ref, b2_ref, w3_ref, b3_ref, o_ref):
    # fc1 -> (dropout = identity at inference) -> relu     [bias + ReLU in f32]
    h1 = jnp.dot(x_ref[...], w1_ref[...], preferred_element_type=jnp.float32)
    h1 = jnp.maximum(h1 + b1_ref[...], 0.0)
    # fc2 -> (dropout = identity) -> relu
    h2 = jnp.dot(h1.astype(w2_ref.dtype), w2_ref[...],
                 preferred_element_type=jnp.float32)
    h2 = jnp.maximum(h2 + b2_ref[...], 0.0)
    # fc3 (no activation); bias added in f32 before the output cast
    out = jnp.dot(h2.astype(w3_ref.dtype), w3_ref[...],
                  preferred_element_type=jnp.float32) + b3_ref[...]
    o_ref[...] = out.astype(o_ref.dtype)


def acoustic_embedding(x, params, *, block_b=2048, compute_dtype=jnp.bfloat16,
                       out_dtype=jnp.float32):
    """x: [B, input_dims]. params: dict of w1,b1,w2,b2,w3,b3 (weights [in,out], biases [1,out])."""
    B, Din = x.shape
    w1, b1 = params["w1"], params["b1"]   # [Din,128], [1,128]
    w2, b2 = params["w2"], params["b2"]   # [128,256], [1,256]
    w3, b3 = params["w3"], params["b3"]   # [256,Dout], [1,Dout]
    Dout = w3.shape[1]

    # Optional low-precision operands (f32 MXU accumulation inside the kernel).
    if compute_dtype is not None:
        x = x.astype(compute_dtype)
        w1 = w1.astype(compute_dtype)
        w2 = w2.astype(compute_dtype)
        w3 = w3.astype(compute_dtype)
    # Biases stay f32: bias + ReLU epilogue runs in f32 (v5e-friendly VPU).
    b1 = b1.astype(jnp.float32)
    b2 = b2.astype(jnp.float32)
    b3 = b3.astype(jnp.float32)

    # Batch tile: multiple of the dtype's sublane packing, and clamped so the grid has
    # >= 2 steps whenever the batch allows it (keeps both v7x TensorCores busy and
    # overlaps the per-step pipeline overhead).
    packing = _sublane_packing(x.dtype)
    half_b = _round_up((B + 1) // 2, packing)
    block_b_eff = max(packing, min(_round_up(block_b, packing), half_b))
    grid = (pl.cdiv(B, block_b_eff),)

    itemsize = lambda a: jnp.dtype(a.dtype).itemsize
    out_isz = jnp.dtype(out_dtype).itemsize
    flops = 2 * B * (Din * 128 + 128 * 256 + 256 * Dout)
    bytes_accessed = (
        B * Din * itemsize(x) + B * Dout * out_isz
        + w1.size * itemsize(w1) + w2.size * itemsize(w2) + w3.size * itemsize(w3)
        + b1.size * 4 + b2.size * 4 + b3.size * 4
    )

    # Scoped-VMEM budget: double-buffered x / out tiles + resident weights + f32
    # intermediates, with 2x headroom; never below the 32 MiB v6e/v7x default and
    # never above v7x's 64 MiB physical VMEM.
    tile_bytes = (
        2 * block_b_eff * Din * itemsize(x)
        + 2 * block_b_eff * Dout * out_isz
        + 2 * (w1.size * itemsize(w1) + w2.size * itemsize(w2) + w3.size * itemsize(w3)
               + (b1.size + b2.size + b3.size) * 4)
        + block_b_eff * (128 + 256 + Dout) * 4
    )
    vmem_limit = max(32 * 1024 * 1024, min(2 * tile_bytes, 64 * 1024 * 1024))

    out = pl.pallas_call(
        _mlp_kernel,
        out_shape=jax.ShapeDtypeStruct((B, Dout), out_dtype),
        grid_spec=pltpu.PrefetchScalarGridSpec(
            num_scalar_prefetch=0,
            grid=grid,
            in_specs=[
                # activations: tiled over batch (ragged final tile masked by Pallas;
                # safe because every op in the kernel is row-independent)
                pl.BlockSpec((block_b_eff, Din), lambda i: (i, 0)),
                # weights / biases: full arrays, constant index -> resident, no re-DMA
                pl.BlockSpec(w1.shape, lambda i: (0, 0)),
                pl.BlockSpec(b1.shape, lambda i: (0, 0)),
                pl.BlockSpec(w2.shape, lambda i: (0, 0)),
                pl.BlockSpec(b2.shape, lambda i: (0, 0)),
                pl.BlockSpec(w3.shape, lambda i: (0, 0)),
                pl.BlockSpec(b3.shape, lambda i: (0, 0)),
            ],
            # Unpadded last dim (== full array dim): masked vst is cheap, and it avoids
            # the padded-slab write + external slice copy entirely.
            out_specs=pl.BlockSpec((block_b_eff, Dout), lambda i: (i, 0)),
        ),
        compiler_params=pltpu.CompilerParams(
            dimension_semantics=("parallel",),
            vmem_limit_bytes=vmem_limit),
        cost_estimate=pl.CostEstimate(
            flops=flops, transcendentals=0, bytes_accessed=bytes_accessed),
    )(x, w1, b1, w2, b2, w3, b3)

    return out


def init_params(key, input_dims, output_dims, dtype=jnp.float32):
    """Deterministic synthetic init (PyTorch-Linear-like uniform fan-in bounds)."""
    ks = jax.random.split(key, 6)

    def lin(kw, kb, fan_in, fan_out):
        bound = 1.0 / jnp.sqrt(fan_in)
        w = jax.random.uniform(kw, (fan_in, fan_out), dtype, -bound, bound)
        b = jax.random.uniform(kb, (1, fan_out), dtype, -bound, bound)
        return w, b

    w1, b1 = lin(ks[0], ks[1], input_dims, 128)
    w2, b2 = lin(ks[2], ks[3], 128, 256)
    w3, b3 = lin(ks[4], ks[5], 256, output_dims)
    return dict(w1=w1, b1=b1, w2=w2, b2=b2, w3=w3, b3=b3)


def reference(x, p):
    h1 = jnp.maximum(x @ p["w1"] + p["b1"], 0.0)
    h2 = jnp.maximum(h1 @ p["w2"] + p["b2"], 0.0)
    return h2 @ p["w3"] + p["b3"]


if __name__ == "__main__":
    key = jax.random.PRNGKey(0)
    input_dims, output_dims = 64, 32

    kx, kx2, kp = jax.random.split(key, 3)
    params = init_params(kp, input_dims, output_dims)

    # f32-operand path: tight tolerance vs. pure-JAX reference.
    x = jax.random.normal(kx, (16, input_dims), jnp.float32)
    ref = reference(x, params)
    out_f32 = jax.block_until_ready(
        acoustic_embedding(x, params, compute_dtype=jnp.float32))
    assert out_f32.shape == (16, output_dims), out_f32.shape
    assert jnp.allclose(out_f32, ref, atol=1e-4, rtol=1e-4), \
        float(jnp.max(jnp.abs(out_f32 - ref)))

    # Default path (bf16 operands, f32 accumulation + f32 output): loose tolerance.
    out_bf16 = jax.block_until_ready(acoustic_embedding(x, params))
    assert out_bf16.shape == (16, output_dims), out_bf16.shape
    assert out_bf16.dtype == jnp.float32
    assert jnp.allclose(out_bf16, ref, atol=1e-1, rtol=1e-1), \
        float(jnp.max(jnp.abs(out_bf16 - ref)))

    # Ragged batch: exercises >=2-step grid + masked final tile (no wrapper-side pads).
    x2 = jax.random.normal(kx2, (200, input_dims), jnp.float32)
    ref2 = reference(x2, params)
    out2 = jax.block_until_ready(acoustic_embedding(x2, params, block_b=128))
    assert out2.shape == (200, output_dims), out2.shape
    assert jnp.allclose(out2, ref2, atol=1e-1, rtol=1e-1), \
        float(jnp.max(jnp.abs(out2 - ref2)))

    # bf16 output variant (consumer-tolerant path).
    out3 = jax.block_until_ready(
        acoustic_embedding(x, params, out_dtype=jnp.bfloat16))
    assert out3.shape == (16, output_dims) and out3.dtype == jnp.bfloat16
    assert jnp.allclose(out3.astype(jnp.float32), ref, atol=2e-1, rtol=2e-1), \
        float(jnp.max(jnp.abs(out3.astype(jnp.float32) - ref)))

    print("KERNEL_OK")
</pallas_src>

<mosaic_0001>
module attributes {stable_mosaic.version = 11 : i64} {
  func.func @_mlp_kernel(%arg0: i32, %arg1: memref<8x64xf32, #tpu.memory_space<vmem>>, %arg2: memref<64x128xf32, #tpu.memory_space<vmem>>, %arg3: memref<1x128xf32, #tpu.memory_space<vmem>>, %arg4: memref<128x256xf32, #tpu.memory_space<vmem>>, %arg5: memref<1x256xf32, #tpu.memory_space<vmem>>, %arg6: memref<256x32xf32, #tpu.memory_space<vmem>>, %arg7: memref<1x32xf32, #tpu.memory_space<vmem>>, %arg8: memref<8x32xf32, #tpu.memory_space<vmem>>) attributes {dimension_semantics = [#tpu.dimension_semantics<parallel>], iteration_bounds = array<i64: 2>, scalar_prefetch = 0 : i64, scratch_operands = 0 : i64, tpu.core_type = #tpu.core_type<tc>, window_params = [{transform_indices = @transform_0, window_bounds = array<i64: 8, 64>}, {pipeline_mode = #tpu.pipeline_mode<synchronous>, transform_indices = @transform_1, window_bounds = array<i64: 64, 128>}, {pipeline_mode = #tpu.pipeline_mode<synchronous>, transform_indices = @transform_2, window_bounds = array<i64: 1, 128>}, {pipeline_mode = #tpu.pipeline_mode<synchronous>, transform_indices = @transform_3, window_bounds = array<i64: 128, 256>}, {pipeline_mode = #tpu.pipeline_mode<synchronous>, transform_indices = @transform_4, window_bounds = array<i64: 1, 256>}, {pipeline_mode = #tpu.pipeline_mode<synchronous>, transform_indices = @transform_5, window_bounds = array<i64: 256, 32>}, {pipeline_mode = #tpu.pipeline_mode<synchronous>, transform_indices = @transform_6, window_bounds = array<i64: 1, 32>}, {transform_indices = @transform_7, window_bounds = array<i64: 8, 32>}]} {
    %c0 = arith.constant 0 : index
    %c0_0 = arith.constant 0 : index
    %0 = vector.load %arg1[%c0, %c0_0] : memref<8x64xf32, #tpu.memory_space<vmem>>, vector<8x64xf32>
    %c0_1 = arith.constant 0 : index
    %c0_2 = arith.constant 0 : index
    %1 = vector.load %arg2[%c0_1, %c0_2] : memref<64x128xf32, #tpu.memory_space<vmem>>, vector<64x128xf32>
    %cst = arith.constant dense<0.000000e+00> : vector<8x128xf32>
    %2 = tpu.matmul %0, %1, %cst {dimension_numbers = #tpu.dot_dimension_numbers<[1], [0], [0], [1], [0, 0, 1, 1], [], []>} : vector<8x64xf32>, vector<64x128xf32>, vector<8x128xf32> -> vector<8x128xf32>
    %c0_3 = arith.constant 0 : index
    %c0_4 = arith.constant 0 : index
    %3 = vector.load %arg3[%c0_3, %c0_4] : memref<1x128xf32, #tpu.memory_space<vmem>>, vector<1x128xf32>
    %4 = vector.broadcast %3 : vector<1x128xf32> to vector<8x128xf32>
    %5 = arith.addf %2, %4 : vector<8x128xf32>
    %cst_5 = arith.constant 0.000000e+00 : f32
    %6 = vector.broadcast %cst_5 : f32 to vector<8x128xf32>
    %7 = arith.maximumf %5, %6 : vector<8x128xf32>
    %c0_6 = arith.constant 0 : index
    %c0_7 = arith.constant 0 : index
    %8 = vector.load %arg4[%c0_6, %c0_7] : memref<128x256xf32, #tpu.memory_space<vmem>>, vector<128x256xf32>
    %cst_8 = arith.constant dense<0.000000e+00> : vector<8x256xf32>
    %9 = tpu.matmul %7, %8, %cst_8 {dimension_numbers = #tpu.dot_dimension_numbers<[1], [0], [0], [1], [0, 0, 1, 1], [], []>} : vector<8x128xf32>, vector<128x256xf32>, vector<8x256xf32> -> vector<8x256xf32>
    %c0_9 = arith.constant 0 : index
    %c0_10 = arith.constant 0 : index
    %10 = vector.load %arg5[%c0_9, %c0_10] : memref<1x256xf32, #tpu.memory_space<vmem>>, vector<1x256xf32>
    %11 = vector.broadcast %10 : vector<1x256xf32> to vector<8x256xf32>
    %12 = arith.addf %9, %11 : vector<8x256xf32>
    %cst_11 = arith.constant 0.000000e+00 : f32
    %13 = vector.broadcast %cst_11 : f32 to vector<8x256xf32>
    %14 = arith.maximumf %12, %13 : vector<8x256xf32>
    %c0_12 = arith.constant 0 : index
    %c0_13 = arith.constant 0 : index
    %15 = vector.load %arg6[%c0_12, %c0_13] : memref<256x32xf32, #tpu.memory_space<vmem>>, vector<256x32xf32>
    %cst_14 = arith.constant dense<0.000000e+00> : vector<8x32xf32>
    %16 = tpu.matmul %14, %15, %cst_14 {dimension_numbers = #tpu.dot_dimension_numbers<[1], [0], [0], [1], [0, 0, 1, 1], [], []>} : vector<8x256xf32>, vector<256x32xf32>, vector<8x32xf32> -> vector<8x32xf32>
    %c0_15 = arith.constant 0 : index
    %c0_16 = arith.constant 0 : index
    %17 = vector.load %arg7[%c0_15, %c0_16] : memref<1x32xf32, #tpu.memory_space<vmem>>, vector<1x32xf32>
    %18 = vector.broadcast %17 : vector<1x32xf32> to vector<8x32xf32>
    %19 = arith.addf %16, %18 : vector<8x32xf32>
    %c0_17 = arith.constant 0 : index
    %c0_18 = arith.constant 0 : index
    %20 = vector.load %arg8[%c0_17, %c0_18] : memref<8x32xf32, #tpu.memory_space<vmem>>, vector<8x32xf32>
    tpu.vector_store %arg8[%c0_17, %c0_18], %19 {strides = array<i32>} : memref<8x32xf32, #tpu.memory_space<vmem>>, vector<8x32xf32>,
    return
  }
  func.func @transform_0(%arg0: i32) -> (i32, i32) {
    %c0_i32 = arith.constant 0 : i32
    %c0_i32_0 = arith.constant 0 : i32
    return %arg0, %c0_i32 : i32, i32
  }
  func.func @transform_1(%arg0: i32) -> (i32, i32) {
    %c0_i32 = arith.constant 0 : i32
    %c0_i32_0 = arith.constant 0 : i32
    %c0_i32_1 = arith.constant 0 : i32
    return %c0_i32, %c0_i32_0 : i32, i32
  }
  func.func @transform_2(%arg0: i32) -> (i32, i32) {
    %c0_i32 = arith.constant 0 : i32
    %c0_i32_0 = arith.constant 0 : i32
    %c0_i32_1 = arith.constant 0 : i32
    return %c0_i32, %c0_i32_0 : i32, i32
  }
  func.func @transform_3(%arg0: i32) -> (i32, i32) {
    %c0_i32 = arith.constant 0 : i32
    %c0_i32_0 = arith.constant 0 : i32
    %c0_i32_1 = arith.constant 0 : i32
    return %c0_i32, %c0_i32_0 : i32, i32
  }
  func.func @transform_4(%arg0: i32) -> (i32, i32) {
    %c0_i32 = arith.constant 0 : i32
    %c0_i32_0 = arith.constant 0 : i32
    %c0_i32_1 = arith.constant 0 : i32
    return %c0_i32, %c0_i32_0 : i32, i32
  }
  func.func @transform_5(%arg0: i32) -> (i32, i32) {
    %c0_i32 = arith.constant 0 : i32
    %c0_i32_0 = arith.constant 0 : i32
    %c0_i32_1 = arith.constant 0 : i32
    return %c0_i32, %c0_i32_0 : i32, i32
  }
  func.func @transform_6(%arg0: i32) -> (i32, i32) {
    %c0_i32 = arith.constant 0 : i32
    %c0_i32_0 = arith.constant 0 : i32
    %c0_i32_1 = arith.constant 0 : i32
    return %c0_i32, %c0_i32_0 : i32, i32
  }
  func.func @transform_7(%arg0: i32) -> (i32, i32) {
    %c0_i32 = arith.constant 0 : i32
    %c0_i32_0 = arith.constant 0 : i32
    return %arg0, %c0_i32 : i32, i32
  }
}

</mosaic_0001>

<llo_original>
// kernel: tpu_custom_call.1
$region0: #{tpu_custom_call.1}
  #allocation0 [shape = 'u32[]', space=smem, size = 0x4, offset = 0x4, fixed_abs, tag = 'smem constant byte address 0x4 - core index']
  #allocation1 [shape = 'u32[72,128]{1,0:T(1,128)}', space=vmem, size = 0x9000, scoped, tag = 'internal scratch']
  %s0 = inlined_call_operand.hbm [shape: f32[16,64], index: 0, kind: input, shape index: {}]
  %s1 = inlined_call_operand.vmem [shape: f32[64,128], index: 1, kind: input, shape index: {}]
  %s2 = inlined_call_operand.hbm [shape: f32[1,128], index: 2, kind: input, shape index: {}]
  %s3 = inlined_call_operand.vmem [shape: f32[128,256], index: 3, kind: input, shape index: {}]
  %s4 = inlined_call_operand.vmem [shape: f32[1,256], index: 4, kind: input, shape index: {}]
  %s5 = inlined_call_operand.vmem [shape: f32[256,32], index: 5, kind: input, shape index: {}]
  %s6 = inlined_call_operand.vmem [shape: f32[1,32], index: 6, kind: input, shape index: {}]
  %s7 = inlined_call_operand.hbm [shape: f32[16,32], index: 7, kind: output, shape index: {}]
  %s8 = sld [smem:[#allocation0]]
  $region69: #{tpu_custom_call.1} parent=0
    _
  %s10 = ssub.s32 1, %s8
  %s11 = scalar_select 0, %s10, %s8
  $region1: #{tpu_custom_call.1} parent=0
    #allocation2 [shape = 'u8[8192]{0}', space=vmem, size = 0x2000, scoped, tag = 'input window, operand 0']
    #allocation3 [shape = 's32[2]{0}', space=sflag, size = 0x8, scoped, tag = 'scoped memory for tpu_custom_call.1']
    #allocation4 [shape = 's32[2]{0}', space=sflag, size = 0x8, scoped, tag = 'scoped memory for tpu_custom_call.1']
    #allocation5 [shape = 'u8[512]{0}', space=vmem, size = 0x400, scoped, tag = 'input window, operand 2, single buffered']
    #allocation6 [shape = 's32[1]{0}', space=sflag, size = 0x4, scoped, tag = 'scoped memory for tpu_custom_call.1']
    #allocation7 [shape = 'u8[8192]{0}', space=vmem, size = 0x2000, scoped, tag = 'output window, operand 0']
    %12 = vsyncpa [#allocation3], 0
    %s13 = scalar_lea.sflag [#allocation3], 1
    %14 = vsyncpa %s13, 0
    %15 = vsyncpa [#allocation6], 0
    %16 = vsyncpa [#allocation4], 0
    %s17 = scalar_lea.sflag [#allocation4], 1
    %18 = vsyncpa %s17, 0
    loop: start=0, step=1, limit=4
    $region2: #{tpu_custom_call.1} parent=1 // loop_pre_header
      _
    $region3: #{tpu_custom_call.1} parent=1 // loop_header
      %s20 = sphi 0, %s24
      %p21 = scmp.ge.s32.totalorder %s20, 4
      %s30 = sphi 0, %s32
      %s33 = sphi 0, %s30
      %s34 = sphi 0, %s33
      %s50 = sphi 0, %s34
      %s54 = sphi 0, %s54
      %s56 = sphi 0, %s54
      %s57 = sphi 0, %s56
      %s71 = sphi 0, %s57
      %s75 = sphi 0, %s75
      %s77 = sphi 0, %s75
      %s78 = sphi 0, %s77
      %s92 = sphi 0, %s78
      %s96 = sphi 0, %s96
      %s98 = sphi 0, %s96
      %s99 = sphi 0, %s98
      %s113 = sphi 0, %s99
      %s117 = sphi 0, %s117
      %s119 = sphi 0, %s117
      %s120 = sphi 0, %s119
      %s134 = sphi 0, %s120
      %s138 = sphi 0, %s138
      %s140 = sphi 0, %s138
      %s141 = sphi 0, %s140
      %s155 = sphi 0, %s141
      %s159 = sphi 0, %s159
      %s161 = sphi 0, %s159
      %s162 = sphi 0, %s161
      %s176 = sphi 0, %s162
      %s182 = sphi 0, %s184
      %s185 = sphi 0, %s182
      %s186 = sphi 0, %s185
      %s202 = sphi 0, %s186
    $region4: #{tpu_custom_call.1} parent=1 // loop_header_branch
      %23 = sbr.rel (%p21) target = $region8
    $region5: #{tpu_custom_call.1} parent=1 // loop_body
      %s25 = ssub.s32 %s20, 1
      %s26 = ssub.s32 %s20, 2
      %s27 = sadd.s32 %s20, 1
      %s28 = ssub.s32 %s20, %s27
      %p29 = scmp.eq.s32.totalorder %s28, 0
      %s31 = sadd.s32 %s30, 1
      %s32 = scalar_select %p29, %s30, %s31
      %p35 = pneg %p29
      %p36 = scmp.eq.s32.totalorder %s20, 1
      %p37 = por %p35, %p36
      %p38 = scmp.ne.s32.totalorder %s30, %s33
      %p39 = scmp.eq.s32.totalorder %s20, 0
      %p40 = por %p38, %p39
      %p41 = scmp.ne.s32.totalorder %s30, %s33
      %p42 = scmp.eq.s32.totalorder %s25, 1
      %p43 = por %p41, %p42
      %p44 = scmp.ne.s32.totalorder %s33, %s34
      %p45 = scmp.eq.s32.totalorder %s25, 0
      %p46 = por %p44, %p45
      %p47 = scmp.ne.s32.totalorder %s33, %s34
      %p48 = scmp.eq.s32.totalorder %s26, 1
      %p49 = por %p47, %p48
      %p51 = scmp.ne.s32.totalorder %s34, %s50
      %p52 = scmp.eq.s32.totalorder %s26, 0
      %p53 = por %p51, %p52
      %s55 = sadd.s32 %s54, 1
      %p58 = scmp.eq.s32.totalorder %s20, 1
      %p59 = scmp.ne.s32.totalorder %s54, %s56
      %p60 = scmp.eq.s32.totalorder %s20, 0
      %p61 = por %p59, %p60
      %p62 = scmp.ne.s32.totalorder %s54, %s56
      %p63 = scmp.eq.s32.totalorder %s25, 1
      %p64 = por %p62, %p63
      %p65 = scmp.ne.s32.totalorder %s56, %s57
      %p66 = scmp.eq.s32.totalorder %s25, 0
      %p67 = por %p65, %p66
      %p68 = scmp.ne.s32.totalorder %s56, %s57
      %p69 = scmp.eq.s32.totalorder %s26, 1
      %p70 = por %p68, %p69
      %p72 = scmp.ne.s32.totalorder %s57, %s71
      %p73 = scmp.eq.s32.totalorder %s26, 0
      %p74 = por %p72, %p73
      %s76 = sadd.s32 %s75, 1
      %p79 = scmp.eq.s32.totalorder %s20, 1
      %p80 = scmp.ne.s32.totalorder %s75, %s77
      %p81 = scmp.eq.s32.totalorder %s20, 0
      %p82 = por %p80, %p81
      %p83 = scmp.ne.s32.totalorder %s75, %s77
      %p84 = scmp.eq.s32.totalorder %s25, 1
      %p85 = por %p83, %p84
      %p86 = scmp.ne.s32.totalorder %s77, %s78
      %p87 = scmp.eq.s32.totalorder %s25, 0
      %p88 = por %p86, %p87
      %p89 = scmp.ne.s32.totalorder %s77, %s78
      %p90 = scmp.eq.s32.totalorder %s26, 1
      %p91 = por %p89, %p90
      %p93 = scmp.ne.s32.totalorder %s78, %s92
      %p94 = scmp.eq.s32.totalorder %s26, 0
      %p95 = por %p93, %p94
      %s97 = sadd.s32 %s96, 1
      %p100 = scmp.eq.s32.totalorder %s20, 1
      %p101 = scmp.ne.s32.totalorder %s96, %s98
      %p102 = scmp.eq.s32.totalorder %s20, 0
      %p103 = por %p101, %p102
      %p104 = scmp.ne.s32.totalorder %s96, %s98
      %p105 = scmp.eq.s32.totalorder %s25, 1
      %p106 = por %p104, %p105
      %p107 = scmp.ne.s32.totalorder %s98, %s99
      %p108 = scmp.eq.s32.totalorder %s25, 0
      %p109 = por %p107, %p108
      %p110 = scmp.ne.s32.totalorder %s98, %s99
      %p111 = scmp.eq.s32.totalorder %s26, 1
      %p112 = por %p110, %p111
      %p114 = scmp.ne.s32.totalorder %s99, %s113
      %p115 = scmp.eq.s32.totalorder %s26, 0
      %p116 = por %p114, %p115
      %s118 = sadd.s32 %s117, 1
      %p121 = scmp.eq.s32.totalorder %s20, 1
      %p122 = scmp.ne.s32.totalorder %s117, %s119
      %p123 = scmp.eq.s32.totalorder %s20, 0
      %p124 = por %p122, %p123
      %p125 = scmp.ne.s32.totalorder %s117, %s119
      %p126 = scmp.eq.s32.totalorder %s25, 1
      %p127 = por %p125, %p126
      %p128 = scmp.ne.s32.totalorder %s119, %s120
      %p129 = scmp.eq.s32.totalorder %s25, 0
      %p130 = por %p128, %p129
      %p131 = scmp.ne.s32.totalorder %s119, %s120
      %p132 = scmp.eq.s32.totalorder %s26, 1
      %p133 = por %p131, %p132
      %p135 = scmp.ne.s32.totalorder %s120, %s134
      %p136 = scmp.eq.s32.totalorder %s26, 0
      %p137 = por %p135, %p136
      %s139 = sadd.s32 %s138, 1
      %p142 = scmp.eq.s32.totalorder %s20, 1
      %p143 = scmp.ne.s32.totalorder %s138, %s140
      %p144 = scmp.eq.s32.totalorder %s20, 0
      %p145 = por %p143, %p144
      %p146 = scmp.ne.s32.totalorder %s138, %s140
      %p147 = scmp.eq.s32.totalorder %s25, 1
      %p148 = por %p146, %p147
      %p149 = scmp.ne.s32.totalorder %s140, %s141
      %p150 = scmp.eq.s32.totalorder %s25, 0
      %p151 = por %p149, %p150
      %p152 = scmp.ne.s32.totalorder %s140, %s141
      %p153 = scmp.eq.s32.totalorder %s26, 1
      %p154 = por %p152, %p153
      %p156 = scmp.ne.s32.totalorder %s141, %s155
      %p157 = scmp.eq.s32.totalorder %s26, 0
      %p158 = por %p156, %p157
      %s160 = sadd.s32 %s159, 1
      %p163 = scmp.eq.s32.totalorder %s20, 1
      %p164 = scmp.ne.s32.totalorder %s159, %s161
      %p165 = scmp.eq.s32.totalorder %s20, 0
      %p166 = por %p164, %p165
      %p167 = scmp.ne.s32.totalorder %s159, %s161
      %p168 = scmp.eq.s32.totalorder %s25, 1
      %p169 = por %p167, %p168
      %p170 = scmp.ne.s32.totalorder %s161, %s162
      %p171 = scmp.eq.s32.totalorder %s25, 0
      %p172 = por %p170, %p171
      %p173 = scmp.ne.s32.totalorder %s161, %s162
      %p174 = scmp.eq.s32.totalorder %s26, 1
      %p175 = por %p173, %p174
      %p177 = scmp.ne.s32.totalorder %s162, %s176
      %p178 = scmp.eq.s32.totalorder %s26, 0
      %p179 = por %p177, %p178
      %s180 = ssub.s32 %s20, %s27
      %p181 = scmp.eq.s32.totalorder %s180, 0
      %s183 = sadd.s32 %s182, 1
      %s184 = scalar_select %p181, %s182, %s183
      %p187 = pneg %p181
      %p188 = scmp.eq.s32.totalorder %s20, 1
      %p189 = por %p187, %p188
      %p190 = scmp.ne.s32.totalorder %s182, %s185
      %p191 = scmp.eq.s32.totalorder %s20, 0
      %p192 = por %p190, %p191
      %p193 = scmp.ne.s32.totalorder %s182, %s185
      %p194 = scmp.eq.s32.totalorder %s25, 1
      %p195 = por %p193, %p194
      %p196 = scmp.ne.s32.totalorder %s185, %s186
      %p197 = scmp.eq.s32.totalorder %s25, 0
      %p198 = por %p196, %p197
      %p199 = scmp.ne.s32.totalorder %s185, %s186
      %p200 = scmp.eq.s32.totalorder %s26, 1
      %p201 = por %p199, %p200
      %p203 = scmp.ne.s32.totalorder %s186, %s202
      %p204 = scmp.eq.s32.totalorder %s26, 0
      %p205 = por %p203, %p204
      %p206 = scmp.le.s32.totalorder 1, %s20
      %p207 = scmp.lt.s32.totalorder %s20, 3
      %p208 = pnand %p206, %p207
      %p209 = pneg %p208
      // Predicated region
      $region9: #{tpu_custom_call.1} parent=5 // pred_check
        _
      $region10: #{tpu_custom_call.1} parent=5 // pred_check_branch
        %211 = sbr.rel (%p208) target = $region12
      $region11: #{tpu_custom_call.1} parent=5 // pred_region
        %s212 = ssub.s32 %s20, 1
        // Predicated region
        $region13: #{tpu_custom_call.1} parent=11 // pred_check
          %p213 = pneg %p67
        $region14: #{tpu_custom_call.1} parent=11 // pred_check_branch
          %215 = sbr.rel (%p213) target = $region16
        $region15: #{tpu_custom_call.1} parent=11 // pred_region
          _
        $region16: #{tpu_custom_call.1} parent=11 // pred_fallthru
          _
        // Predicated region
        $region17: #{tpu_custom_call.1} parent=11 // pred_check
          %p216 = pneg %p88
        $region18: #{tpu_custom_call.1} parent=11 // pred_check_branch
          %218 = sbr.rel (%p216) target = $region20
        $region19: #{tpu_custom_call.1} parent=11 // pred_region
          %220 = vsyncadd [#allocation6], 0
          %s222 = sshll.u32 %s2, 4
          %s223 = int_to_ptr.hbm [resolvable:$true] %s222
          %s224 = sshll.u32 [#allocation5], 4
          %s225 = int_to_ptr.vmem [resolvable:$true] %s224
          %227 = dma.hbm_to_vmem [thread:$0]  %s223, 16, %s225, [#allocation6]
        $region20: #{tpu_custom_call.1} parent=11 // pred_fallthru
          _
        // Predicated region
        $region21: #{tpu_custom_call.1} parent=11 // pred_check
          %p228 = pneg %p109
        $region22: #{tpu_custom_call.1} parent=11 // pred_check_branch
          %230 = sbr.rel (%p228) target = $region24
        $region23: #{tpu_custom_call.1} parent=11 // pred_region
          _
        $region24: #{tpu_custom_call.1} parent=11 // pred_fallthru
          _
        // Predicated region
        $region25: #{tpu_custom_call.1} parent=11 // pred_check
          %p231 = pneg %p130
        $region26: #{tpu_custom_call.1} parent=11 // pred_check_branch
          %233 = sbr.rel (%p231) target = $region28
        $region27: #{tpu_custom_call.1} parent=11 // pred_region
          _
        $region28: #{tpu_custom_call.1} parent=11 // pred_fallthru
          _
        // Predicated region
        $region29: #{tpu_custom_call.1} parent=11 // pred_check
          %p234 = pneg %p151
        $region30: #{tpu_custom_call.1} parent=11 // pred_check_branch
          %236 = sbr.rel (%p234) target = $region32
        $region31: #{tpu_custom_call.1} parent=11 // pred_region
          _
        $region32: #{tpu_custom_call.1} parent=11 // pred_fallthru
          _
        // Predicated region
        $region33: #{tpu_custom_call.1} parent=11 // pred_check
          %p237 = pneg %p172
        $region34: #{tpu_custom_call.1} parent=11 // pred_check_branch
          %239 = sbr.rel (%p237) target = $region36
        $region35: #{tpu_custom_call.1} parent=11 // pred_region
          _
        $region36: #{tpu_custom_call.1} parent=11 // pred_fallthru
          _
      $region12: #{tpu_custom_call.1} parent=5 // pred_fallthru
        _
      %p240 = scmp.lt.s32.totalorder %s20, 2
      // Predicated region
      $region37: #{tpu_custom_call.1} parent=5 // pred_check
        %p241 = pneg %p240
      $region38: #{tpu_custom_call.1} parent=5 // pred_check_branch
        %243 = sbr.rel (%p241) target = $region40
      $region39: #{tpu_custom_call.1} parent=5 // pred_region
        // Predicated region
        $region41: #{tpu_custom_call.1} parent=39 // pred_check
          %p244 = pneg %p40
        $region42: #{tpu_custom_call.1} parent=39 // pred_check_branch
          %246 = sbr.rel (%p244) target = $region44
        $region43: #{tpu_custom_call.1} parent=39 // pred_region
          %s247 = sand.u32 %s30, 1
          %s248 = scalar_lea.sflag [#allocation3], %s247
          %s249 = sand.u32 %s30, 1
          %s250 = smul.addr %s249, 8
          %s251 = scalar_lea.vmem [#allocation2], %s250
          %253 = vsyncadd %s248, 0
          %s254 = smul.addr %s20, 8
          %s255 = scalar_lea.hbm %s0, %s254
          %s257 = sshll.u32 %s255, 4
          %s258 = int_to_ptr.hbm [resolvable:$true] %s257
          %s259 = sshll.u32 %s251, 4
          %s260 = int_to_ptr.vmem [resolvable:$true] %s259
          %262 = dma.hbm_to_vmem [thread:$0]  %s258, 128, %s260, %s248
        $region44: #{tpu_custom_call.1} parent=39 // pred_fallthru
          _
      $region40: #{tpu_custom_call.1} parent=5 // pred_fallthru
        _
      %p263 = scmp.le.s32.totalorder 1, %s20
      %p264 = scmp.lt.s32.totalorder %s20, 3
      %p265 = pnand %p263, %p264
      %p266 = pneg %p265
      // Predicated region
      $region45: #{tpu_custom_call.1} parent=5 // pred_check
        _
      $region46: #{tpu_custom_call.1} parent=5 // pred_check_branch
        %268 = sbr.rel (%p265) target = $region48
      $region47: #{tpu_custom_call.1} parent=5 // pred_region
        %s269 = ssub.s32 %s20, 1
        %s270 = sand.u32 %s33, 1
        %s271 = scalar_lea.sflag [#allocation3], %s270
        %s272 = sand.u32 %s33, 1
        %s273 = smul.addr %s272, 8
        %s274 = scalar_lea.vmem [#allocation2], %s273
        // Predicated region
        $region49: #{tpu_custom_call.1} parent=47 // pred_check
          %p275 = pneg %p46
        $region50: #{tpu_custom_call.1} parent=47 // pred_check_branch
          %277 = sbr.rel (%p275) target = $region52
        $region51: #{tpu_custom_call.1} parent=47 // pred_region
          %279 = dma.done %s271, 128
        $region52: #{tpu_custom_call.1} parent=47 // pred_fallthru
          _
        // Predicated region
        $region53: #{tpu_custom_call.1} parent=47 // pred_check
          %p280 = pneg %p88
        $region54: #{tpu_custom_call.1} parent=47 // pred_check_branch
          %282 = sbr.rel (%p280) target = $region56
        $region55: #{tpu_custom_call.1} parent=47 // pred_region
          %284 = dma.done [#allocation6], 16
        $region56: #{tpu_custom_call.1} parent=47 // pred_fallthru
          _
        %s285 = sand.u32 %s33, 1
        %s286 = scalar_lea.sflag [#allocation3], %s285
        %s287 = sand.u32 %s33, 1
        %s288 = smul.addr %s287, 8
        %s289 = scalar_lea.vmem [#allocation2], %s288
        %p290 = pneg %p46
        %p291 = pneg %p43
        %p292 = pneg %p67
        %p293 = pneg %p64
        %p294 = pneg %p88
        %p295 = pneg %p85
        %p296 = pneg %p109
        %p297 = pneg %p106
        %p298 = pneg %p130
        %p299 = pneg %p127
        %p300 = pneg %p151
        %p301 = pneg %p148
        %p302 = pneg %p172
        %p303 = pneg %p169
        %p304 = pneg %p198
        %p305 = pneg %p195
        %s306 = sand.u32 %s185, 1
        %s307 = scalar_lea.sflag [#allocation4], %s306
        %s308 = sand.u32 %s185, 1
        %s309 = smul.addr %s308, 8
        %s310 = scalar_lea.vmem [#allocation7], %s309
        %v311 = vld [vmem:[%s274] sm:$0xff]
        %v312 = vld [vmem:[%s1] sm:$0xff]
        %v313 = vld [vmem:[%s1 + $0x8] sm:$0xff]
        %v314 = vld [vmem:[%s1 + $0x10] sm:$0xff]
        %v315 = vld [vmem:[%s1 + $0x18] sm:$0xff]
        %v316 = vld [vmem:[%s1 + $0x20] sm:$0xff]
        %v317 = vld [vmem:[%s1 + $0x28] sm:$0xff]
        %v318 = vld [vmem:[%s1 + $0x30] sm:$0xff]
        %v319 = vld [vmem:[%s1 + $0x38] sm:$0xff]
        %v320 = vld [vmem:[#allocation5] sm:$0x1]
        %v322 = vperm.slane %v320, 0
        %vm324 = vcmask 523264
        %v326 = vsel %vm324, %v311, 0
        %328 = vmatpush.msra.mxu0 0.0
        %329 = vmatpush.msra.mxu0 0.0
        %330 = vmatpush.msra.mxu0 0.0
        %331 = vmatpush.msra.mxu0 0.0
        %332 = vmatpush.msra.mxu0 0.0
        %333 = vmatpush.msra.mxu0 0.0
        %334 = vmatpush.msra.mxu0 0.0
        %335 = vmatpush.msra.mxu0 0.0
        %336 = vmatpush.msra.mxu0 %v319
        %337 = vmatpush.msra.mxu0 %v318
        %338 = vmatpush.msra.mxu0 %v317
        %339 = vmatpush.msra.mxu0 %v316
        %340 = vmatpush.msra.mxu0 %v315
        %341 = vmatpush.msra.mxu0 %v314
        %342 = vmatpush.msra.mxu0 %v313
        %343 = vmatpush.msra.mxu0 %v312
        %344 = vmatmul.f32.gmra.mxu0 %v326
        %v345 = vpop.f32.mrf.mxu0
        %v346 = vadd.f32 %v322, %v345
        %347 = vdwg.mxu0
        %v348 = vmax.f32 %v346, 0.0
        %v349 = vld [vmem:[%s3] sm:$0xff]
        %v350 = vld [vmem:[%s3 + $0x8] sm:$0xff]
        %v351 = vld [vmem:[%s3 + $0x10] sm:$0xff]
        %v352 = vld [vmem:[%s3 + $0x18] sm:$0xff]
        %v353 = vld [vmem:[%s3 + $0x20] sm:$0xff]
        %v354 = vld [vmem:[%s3 + $0x28] sm:$0xff]
        %v355 = vld [vmem:[%s3 + $0x30] sm:$0xff]
        %v356 = vld [vmem:[%s3 + $0x38] sm:$0xff]
        %v357 = vld [vmem:[%s3 + $0x40] sm:$0xff]
        %v358 = vld [vmem:[%s3 + $0x48] sm:$0xff]
        %v359 = vld [vmem:[%s3 + $0x50] sm:$0xff]
        %v360 = vld [vmem:[%s3 + $0x58] sm:$0xff]
        %v361 = vld [vmem:[%s3 + $0x60] sm:$0xff]
        %v362 = vld [vmem:[%s3 + $0x68] sm:$0xff]
        %v363 = vld [vmem:[%s3 + $0x70] sm:$0xff]
        %v364 = vld [vmem:[%s3 + $0x78] sm:$0xff]
        %v365 = vld [vmem:[%s3 + $0x80] sm:$0xff]
        %v366 = vld [vmem:[%s3 + $0x88] sm:$0xff]
        %v367 = vld [vmem:[%s3 + $0x90] sm:$0xff]
        %v368 = vld [vmem:[%s3 + $0x98] sm:$0xff]
        %v369 = vld [vmem:[%s3 + $0xa0] sm:$0xff]
        %v370 = vld [vmem:[%s3 + $0xa8] sm:$0xff]
        %v371 = vld [vmem:[%s3 + $0xb0] sm:$0xff]
        %v372 = vld [vmem:[%s3 + $0xb8] sm:$0xff]
        %v373 = vld [vmem:[%s3 + $0xc0] sm:$0xff]
        %v374 = vld [vmem:[%s3 + $0xc8] sm:$0xff]
        %v375 = vld [vmem:[%s3 + $0xd0] sm:$0xff]
        %v376 = vld [vmem:[%s3 + $0xd8] sm:$0xff]
        %v377 = vld [vmem:[%s3 + $0xe0] sm:$0xff]
        %v378 = vld [vmem:[%s3 + $0xe8] sm:$0xff]
        %v379 = vld [vmem:[%s3 + $0xf0] sm:$0xff]
        %v380 = vld [vmem:[%s3 + $0xf8] sm:$0xff]
        %v381 = vld [vmem:[%s4] sm:$0x3]
        %v383 = vperm.slane %v381, 0
        %v384 = vperm.slane %v381, 1
        %387 = vmatpush.msra.mxu0 %v379
        %388 = vmatpush.msra.mxu0 %v377
        %389 = vmatpush.msra.mxu0 %v375
        %390 = vmatpush.msra.mxu0 %v373
        %391 = vmatpush.msra.mxu0 %v371
        %392 = vmatpush.msra.mxu0 %v369
        %393 = vmatpush.msra.mxu0 %v367
        %394 = vmatpush.msra.mxu0 %v365
        %395 = vmatpush.msra.mxu0 %v363
        %396 = vmatpush.msra.mxu0 %v361
        %397 = vmatpush.msra.mxu0 %v359
        %398 = vmatpush.msra.mxu0 %v357
        %399 = vmatpush.msra.mxu0 %v355
        %400 = vmatpush.msra.mxu0 %v353
        %401 = vmatpush.msra.mxu0 %v351
        %402 = vmatpush.msra.mxu0 %v349
        %403 = vmatmul.f32.gmra.mxu0 %v348
        %v404 = vpop.f32.mrf.mxu0
        %v405 = vadd.f32 %v383, %v404
        %406 = vdwg.mxu0
        %407 = vmatpush.msra.mxu0 %v380
        %408 = vmatpush.msra.mxu0 %v378
        %409 = vmatpush.msra.mxu0 %v376
        %410 = vmatpush.msra.mxu0 %v374
        %411 = vmatpush.msra.mxu0 %v372
        %412 = vmatpush.msra.mxu0 %v370
        %413 = vmatpush.msra.mxu0 %v368
        %414 = vmatpush.msra.mxu0 %v366
        %415 = vmatpush.msra.mxu0 %v364
        %416 = vmatpush.msra.mxu0 %v362
        %417 = vmatpush.msra.mxu0 %v360
        %418 = vmatpush.msra.mxu0 %v358
        %419 = vmatpush.msra.mxu0 %v356
        %420 = vmatpush.msra.mxu0 %v354
        %421 = vmatpush.msra.mxu0 %v352
        %422 = vmatpush.msra.mxu0 %v350
        %423 = vmatmul.f32.gmra.mxu0 %v348
        %v424 = vpop.f32.mrf.mxu0
        %v425 = vadd.f32 %v384, %v424
        %426 = vdwg.mxu0
        %v427 = vmax.f32 %v405, 0.0
        %v428 = vmax.f32 %v425, 0.0
        %v429 = vld [vmem:[%s5] sm:$0xff]
        %v430 = vld [vmem:[%s5 + $0x8] sm:$0xff]
        %v431 = vld [vmem:[%s5 + $0x10] sm:$0xff]
        %v432 = vld [vmem:[%s5 + $0x18] sm:$0xff]
        %v433 = vld [vmem:[%s5 + $0x20] sm:$0xff]
        %v434 = vld [vmem:[%s5 + $0x28] sm:$0xff]
        %v435 = vld [vmem:[%s5 + $0x30] sm:$0xff]
        %v436 = vld [vmem:[%s5 + $0x38] sm:$0xff]
        %v437 = vld [vmem:[%s5 + $0x40] sm:$0xff]
        %v438 = vld [vmem:[%s5 + $0x48] sm:$0xff]
        %v439 = vld [vmem:[%s5 + $0x50] sm:$0xff]
        %v440 = vld [vmem:[%s5 + $0x58] sm:$0xff]
        %v441 = vld [vmem:[%s5 + $0x60] sm:$0xff]
        %v442 = vld [vmem:[%s5 + $0x68] sm:$0xff]
        %v443 = vld [vmem:[%s5 + $0x70] sm:$0xff]
        %v444 = vld [vmem:[%s5 + $0x78] sm:$0xff]
        %v445 = vld [vmem:[%s5 + $0x80] sm:$0xff]
        %v446 = vld [vmem:[%s5 + $0x88] sm:$0xff]
        %v447 = vld [vmem:[%s5 + $0x90] sm:$0xff]
        %v448 = vld [vmem:[%s5 + $0x98] sm:$0xff]
        %v449 = vld [vmem:[%s5 + $0xa0] sm:$0xff]
        %v450 = vld [vmem:[%s5 + $0xa8] sm:$0xff]
        %v451 = vld [vmem:[%s5 + $0xb0] sm:$0xff]
        %v452 = vld [vmem:[%s5 + $0xb8] sm:$0xff]
        %v453 = vld [vmem:[%s5 + $0xc0] sm:$0xff]
        %v454 = vld [vmem:[%s5 + $0xc8] sm:$0xff]
        %v455 = vld [vmem:[%s5 + $0xd0] sm:$0xff]
        %v456 = vld [vmem:[%s5 + $0xd8] sm:$0xff]
        %v457 = vld [vmem:[%s5 + $0xe0] sm:$0xff]
        %v458 = vld [vmem:[%s5 + $0xe8] sm:$0xff]
        %v459 = vld [vmem:[%s5 + $0xf0] sm:$0xff]
        %v460 = vld [vmem:[%s5 + $0xf8] sm:$0xff]
        %v461 = vld [vmem:[%s6] sm:$0x1]
        %v463 = vperm.slane %v461, 0
        %465 = vmatpush.msra.mxu0 %v444
        %466 = vmatpush.msra.mxu0 %v443
        %467 = vmatpush.msra.mxu0 %v442
        %468 = vmatpush.msra.mxu0 %v441
        %469 = vmatpush.msra.mxu0 %v440
        %470 = vmatpush.msra.mxu0 %v439
        %471 = vmatpush.msra.mxu0 %v438
        %472 = vmatpush.msra.mxu0 %v437
        %473 = vmatpush.msra.mxu0 %v436
        %474 = vmatpush.msra.mxu0 %v435
        %475 = vmatpush.msra.mxu0 %v434
        %476 = vmatpush.msra.mxu0 %v433
        %477 = vmatpush.msra.mxu0 %v432
        %478 = vmatpush.msra.mxu0 %v431
        %479 = vmatpush.msra.mxu0 %v430
        %480 = vmatpush.msra.mxu0 %v429
        %481 = vmatmul.f32.gmra.mxu0 %v427
        %v482 = vpop.f32.mrf.mxu0
        %v483 = vadd.f32 %v463, %v482
        %484 = vdwg.mxu0
        %485 = vmatpush.msra.mxu0 %v460
        %486 = vmatpush.msra.mxu0 %v459
        %487 = vmatpush.msra.mxu0 %v458
        %488 = vmatpush.msra.mxu0 %v457
        %489 = vmatpush.msra.mxu0 %v456
        %490 = vmatpush.msra.mxu0 %v455
        %491 = vmatpush.msra.mxu0 %v454
        %492 = vmatpush.msra.mxu0 %v453
        %493 = vmatpush.msra.mxu0 %v452
        %494 = vmatpush.msra.mxu0 %v451
        %495 = vmatpush.msra.mxu0 %v450
        %496 = vmatpush.msra.mxu0 %v449
        %497 = vmatpush.msra.mxu0 %v448
        %498 = vmatpush.msra.mxu0 %v447
        %499 = vmatpush.msra.mxu0 %v446
        %500 = vmatpush.msra.mxu0 %v445
        %501 = vmatmul.f32.gmra.mxu0 %v428
        %v502 = vpop.f32.mrf.mxu0
        %v503 = vadd.f32 %v483, %v502
        %504 = vdwg.mxu0
        %vm505 = vcmask 261120
        %506 = vst.msk [vmem:[%s310] sm:$0xff] %vm505, %v503
        %s507 = sand.u32 %s185, 1
        %s508 = scalar_lea.sflag [#allocation4], %s507
        %s509 = sand.u32 %s185, 1
        %s510 = smul.addr %s509, 8
        %s511 = scalar_lea.vmem [#allocation7], %s510
        // Predicated region
        $region57: #{tpu_custom_call.1} parent=47 // pred_check
          %p512 = pneg %p195
        $region58: #{tpu_custom_call.1} parent=47 // pred_check_branch
          %514 = sbr.rel (%p512) target = $region60
        $region59: #{tpu_custom_call.1} parent=47 // pred_region
          %516 = vsyncadd %s508, 0
          %s517 = smul.addr %s25, 8
          %s518 = scalar_lea.hbm %s7, %s517
          %s520 = sshll.u32 %s511, 4
          %s521 = int_to_ptr.vmem [resolvable:$true] %s520
          %s522 = sshll.u32 %s518, 4
          %s523 = int_to_ptr.hbm [resolvable:$true] %s522
          %525 = dma.vmem_to_hbm [thread:$0]  %s521, 128, %s523, %s508
        $region60: #{tpu_custom_call.1} parent=47 // pred_fallthru
          _
      $region48: #{tpu_custom_call.1} parent=5 // pred_fallthru
        _
      %p526 = scmp.le.s32.totalorder 2, %s20
      // Predicated region
      $region61: #{tpu_custom_call.1} parent=5 // pred_check
        %p527 = pneg %p526
      $region62: #{tpu_custom_call.1} parent=5 // pred_check_branch
        %529 = sbr.rel (%p527) target = $region64
      $region63: #{tpu_custom_call.1} parent=5 // pred_region
        %s530 = ssub.s32 %s20, 2
        // Predicated region
        $region65: #{tpu_custom_call.1} parent=63 // pred_check
          %p531 = pneg %p201
        $region66: #{tpu_custom_call.1} parent=63 // pred_check_branch
          %533 = sbr.rel (%p531) target = $region68
        $region67: #{tpu_custom_call.1} parent=63 // pred_region
          %s534 = sand.u32 %s186, 1
          %s535 = scalar_lea.sflag [#allocation4], %s534
          %s536 = sand.u32 %s186, 1
          %s537 = smul.addr %s536, 8
          %s538 = scalar_lea.vmem [#allocation7], %s537
          %540 = dma.done %s535, 128
        $region68: #{tpu_custom_call.1} parent=63 // pred_fallthru
          _
      $region64: #{tpu_custom_call.1} parent=5 // pred_fallthru
        _
    $region6: #{tpu_custom_call.1} parent=1 // loop_footer
      %s24 = sadd.s32 1, %s20
    $region7: #{tpu_custom_call.1} parent=1 // loop_footer_branch
      %19 = sbr.rel target = $region3
    $region8: #{tpu_custom_call.1} parent=1 // loop_exit
      _
    %541 = vsyncpa [#allocation3], 1
    %s542 = scalar_lea.sflag [#allocation3], 1
    %543 = vsyncpa %s542, 1
    %544 = vsyncpa [#allocation6], 1
    %545 = vsyncpa [#allocation4], 1
    %s546 = scalar_lea.sflag [#allocation4], 1
    %547 = vsyncpa %s546, 1

</llo_original>
